<compile_context>
chip_gen: v6e
topology: v6e:2x2x1
jax: 0.10.0
libtpu: 0.0.40
codegen_flags: <defaults>
</compile_context>

<pallas_src>
import math

import jax
import jax.numpy as jnp
from jax import lax
from jax.experimental import pallas as pl
from jax.experimental.pallas import tpu as pltpu


# ----------------------------------------------------------------------------
# Kernels
# ----------------------------------------------------------------------------
def _make_attention_kernel(nh, hd, H):
    """Fused QKV projection + per-head attention, output in quirk layout."""

    def kernel(x_ref, bias_ref, wqkv_ref, bqkv_ref, o_ref):
        x = x_ref[0]            # (S, H) f32
        bias = bias_ref[0]      # (S, S) f32 additive mask bias (0 or -9e15)

        # Fused projections: one (S,H)@(H,3H) MXU matmul, f32 accumulation.
        # Wq / bq are pre-scaled by 1/sqrt(hd) in the wrapper.
        qkv = jnp.dot(x, wqkv_ref[...],
                      preferred_element_type=jnp.float32) + bqkv_ref[...]

        # Per-head attention (static unroll; nh is small here).
        for h in range(nh):
            lo = h * hd
            q_h = qkv[:, lo:lo + hd]                    # (S, hd), pre-scaled
            k_h = qkv[:, H + lo:H + lo + hd]            # (S, hd)
            v_h = qkv[:, 2 * H + lo:2 * H + lo + hd]    # (S, hd)

            # scores = q_h @ k_h^T  (contract head_dim) + additive mask bias.
            s = lax.dot_general(q_h, k_h, (((1,), (1,)), ((), ())),
                                preferred_element_type=jnp.float32)
            s = s + bias

            # Softmax in f32 (row-max subtraction, exact divide).
            m_row = jnp.max(s, axis=-1, keepdims=True)
            e = jnp.exp(s - m_row)
            l = jnp.sum(e, axis=-1, keepdims=True)
            p = e / l                                   # (S, S)

            # Transposed head output directly on the MXU:
            #   aw_t[a, b] = sum_s v_h[s, a] * p[b, s]  ==  (p @ v_h)^T
            aw_t = lax.dot_general(v_h, p, (((0,), (1,)), ((), ())),
                                   preferred_element_type=jnp.float32)
            # Rows [h*hd : (h+1)*hd) of the (H, S) block == torch's
            # transpose(-1,-2).contiguous() layout for this head.
            o_ref[0, lo:lo + hd, :] = aw_t

    return kernel


def _out_proj_kernel(y_ref, wo_ref, bo_ref, o_ref):
    o_ref[...] = jnp.dot(y_ref[...], wo_ref[...],
                         preferred_element_type=jnp.float32) + bo_ref[...]


def _vmem_limit(block_bytes_list):
    """Generous scoped-VMEM limit from the double-buffered block footprint."""
    footprint = 2 * sum(block_bytes_list)
    return int(min(100 * 2 ** 20, max(16 * 2 ** 20, 4 * footprint)))


# ----------------------------------------------------------------------------
# Wrapper
# ----------------------------------------------------------------------------
def mha_forward(x, attention_mask, params, num_heads):
    """Pallas implementation of MultiHeadAttention.forward."""
    B, S, H = x.shape
    nh = num_heads
    hd = H // nh
    wq, bq, wk, bk, wv, bv, wo, bo = params

    scale = 1.0 / math.sqrt(hd)     # plain Python float

    # Fuse QKV weights (nn.Linear weights are (out, in) -> transpose to
    # (in, out)) and fold the softmax scale into the Q column block.
    wqkv_t = jnp.concatenate(
        [wq.T * scale, wk.T, wv.T], axis=1).astype(jnp.float32)     # (H, 3H)
    bqkv = jnp.concatenate(
        [bq * scale, bk, bv]).reshape(1, 3 * H).astype(jnp.float32)  # (1, 3H)
    wo_t = wo.T.astype(jnp.float32)
    bo2 = bo.reshape(1, H).astype(jnp.float32)
    x_f = x.astype(jnp.float32)

    # Mask -> additive bias, computed once at trace time (no in-kernel
    # compare/select).  Batch-broadcast masks keep a single (1,S,S) block.
    if attention_mask is None:
        bias3 = jnp.zeros((1, S, S), jnp.float32)
    else:
        m3 = attention_mask.reshape(-1, S, S)
        bias3 = jnp.where(m3 == 0, -9e15, 0.0).astype(jnp.float32)
    if bias3.shape[0] == 1:
        bias_index = lambda b: (0, 0, 0)
    else:
        bias_index = lambda b: (b, 0, 0)

    attn_kernel = _make_attention_kernel(nh, hd, H)
    k1_blocks = [S * H * 4, S * S * 4, H * 3 * H * 4, 3 * H * 4, H * S * 4]

    # Kernel 1 output is (B, H, S): per-batch rows are (head, head_dim) and
    # columns are seq -- exactly torch's `.transpose(-1,-2).contiguous()`.
    aw_t = pl.pallas_call(
        attn_kernel,
        out_shape=jax.ShapeDtypeStruct((B, H, S), jnp.float32),
        grid_spec=pltpu.PrefetchScalarGridSpec(
            num_scalar_prefetch=0,
            grid=(B,),
            in_specs=[
                pl.BlockSpec((1, S, H), lambda b: (b, 0, 0)),     # x
                pl.BlockSpec((1, S, S), bias_index),              # mask bias
                pl.BlockSpec((H, 3 * H), lambda b: (0, 0)),       # [Wq*s|Wk|Wv]^T
                pl.BlockSpec((1, 3 * H), lambda b: (0, 0)),       # fused biases
            ],
            out_specs=pl.BlockSpec((1, H, S), lambda b: (b, 0, 0)),
        ),
        compiler_params=pltpu.CompilerParams(
            dimension_semantics=("parallel",),
            vmem_limit_bytes=_vmem_limit(k1_blocks)),
    )(x_f, bias3, wqkv_t, bqkv)

    # Free row-major reinterpretation: (B, H, S) -> (B*S, H) reproduces the
    # PyTorch `.contiguous().view(B, -1, H)` quirk with zero data movement.
    BS = B * S
    y = aw_t.reshape(BS, H)

    # Row-tiled output projection over the flattened (B*S, H) matrix.
    tr = BS
    for cand in (512, 256, 128, 64, 32, 16, 8):
        if BS % cand == 0:
            tr = cand
            break
    k2_blocks = [tr * H * 4, H * H * 4, H * 4, tr * H * 4]

    out = pl.pallas_call(
        _out_proj_kernel,
        out_shape=jax.ShapeDtypeStruct((BS, H), jnp.float32),
        grid_spec=pltpu.PrefetchScalarGridSpec(
            num_scalar_prefetch=0,
            grid=(BS // tr,),
            in_specs=[
                pl.BlockSpec((tr, H), lambda i: (i, 0)),          # y rows
                pl.BlockSpec((H, H), lambda i: (0, 0)),           # Wo^T
                pl.BlockSpec((1, H), lambda i: (0, 0)),           # bo
            ],
            out_specs=pl.BlockSpec((tr, H), lambda i: (i, 0)),
        ),
        compiler_params=pltpu.CompilerParams(
            dimension_semantics=("parallel",),
            vmem_limit_bytes=_vmem_limit(k2_blocks)),
    )(y, wo_t, bo2)

    return out.reshape(B, S, H)


# ----------------------------------------------------------------------------
# Pure-JAX reference (mirrors the PyTorch forward, for validation)
# ----------------------------------------------------------------------------
def mha_reference(x, attention_mask, params, num_heads):
    B, S, H = x.shape
    nh = num_heads
    hd = H // nh
    wq, bq, wk, bk, wv, bv, wo, bo = params

    qx = x @ wq.T + bq                                    # (B, S, H)
    kx = x @ wk.T + bk
    vx = x @ wv.T + bv

    q = qx.reshape(B, S, nh, hd).transpose(0, 2, 1, 3)    # (B, nh, S, hd)
    k = kx.reshape(B, S, nh, hd).transpose(0, 2, 1, 3)
    v = vx.reshape(B, S, nh, hd).transpose(0, 2, 1, 3)

    s = jnp.matmul(q, jnp.swapaxes(k, -1, -2)) / math.sqrt(hd)  # (B, nh, S, S)
    if attention_mask is not None:
        s = jnp.where(attention_mask == 0, -9e15, s)
    p = jax.nn.softmax(s, axis=-1)
    aw = jnp.matmul(p, v)                                 # (B, nh, S, hd)
    y = jnp.swapaxes(aw, -1, -2).reshape(B, S, H)         # torch view quirk
    return y @ wo.T + bo


# ----------------------------------------------------------------------------
# Main
# ----------------------------------------------------------------------------
if __name__ == "__main__":
    B, S, H, NH = 2, 8, 32, 4

    key = jax.random.PRNGKey(0)
    ks = jax.random.split(key, 9)

    x = jax.random.normal(ks[0], (B, S, H), jnp.float32)

    # Deterministic synthetic parameters (nn.Linear shapes: (out, in)).
    wq = jax.random.normal(ks[1], (H, H), jnp.float32) * 0.05
    bq = jax.random.normal(ks[2], (H,), jnp.float32) * 0.05
    wk = jax.random.normal(ks[3], (H, H), jnp.float32) * 0.05
    bk = jax.random.normal(ks[4], (H,), jnp.float32) * 0.05
    wv = jax.random.normal(ks[5], (H, H), jnp.float32) * 0.05
    bv = jax.random.normal(ks[6], (H,), jnp.float32) * 0.05
    wo = jax.random.normal(ks[7], (H, H), jnp.float32) * 0.05
    bo = jax.random.normal(ks[8], (H,), jnp.float32) * 0.05
    params = (wq, bq, wk, bk, wv, bv, wo, bo)

    # Causal attention mask, batch-broadcast (1, 1, S, S), 0 => masked.
    attention_mask = jnp.tril(jnp.ones((S, S), jnp.float32))[None, None]

    out = mha_forward(x, attention_mask, params, NH)
    out = jax.block_until_ready(out)

    ref = mha_reference(x, attention_mask, params, NH)
    assert out.shape == (B, S, H)
    max_diff = jnp.max(jnp.abs(out - ref))
    assert jnp.allclose(out, ref, atol=1e-4, rtol=1e-4), (
        f"max abs diff {max_diff}")

    print("KERNEL_OK")
</pallas_src>

<mosaic_0001>
module attributes {stable_mosaic.version = 11 : i64} {
  func.func @kernel(%arg0: i32, %arg1: memref<1x8x32xf32, #tpu.memory_space<vmem>>, %arg2: memref<1x8x8xf32, #tpu.memory_space<vmem>>, %arg3: memref<32x96xf32, #tpu.memory_space<vmem>>, %arg4: memref<1x96xf32, #tpu.memory_space<vmem>>, %arg5: memref<1x32x8xf32, #tpu.memory_space<vmem>>) attributes {dimension_semantics = [#tpu.dimension_semantics<parallel>], iteration_bounds = array<i64: 2>, scalar_prefetch = 0 : i64, scratch_operands = 0 : i64, tpu.core_type = #tpu.core_type<tc>, window_params = [{transform_indices = @transform_0, window_bounds = array<i64: 1, 8, 32>}, {pipeline_mode = #tpu.pipeline_mode<synchronous>, transform_indices = @transform_1, window_bounds = array<i64: 1, 8, 8>}, {pipeline_mode = #tpu.pipeline_mode<synchronous>, transform_indices = @transform_2, window_bounds = array<i64: 32, 96>}, {pipeline_mode = #tpu.pipeline_mode<synchronous>, transform_indices = @transform_3, window_bounds = array<i64: 1, 96>}, {transform_indices = @transform_4, window_bounds = array<i64: 1, 32, 8>}]} {
    %c0 = arith.constant 0 : index
    %c0_0 = arith.constant 0 : index
    %c0_1 = arith.constant 0 : index
    %0 = vector.load %arg1[%c0, %c0_0, %c0_1] : memref<1x8x32xf32, #tpu.memory_space<vmem>>, vector<1x8x32xf32>
    %1 = vector.shape_cast %0 : vector<1x8x32xf32> to vector<8x32xf32>
    %c0_2 = arith.constant 0 : index
    %c0_3 = arith.constant 0 : index
    %c0_4 = arith.constant 0 : index
    %2 = vector.load %arg2[%c0_2, %c0_3, %c0_4] : memref<1x8x8xf32, #tpu.memory_space<vmem>>, vector<1x8x8xf32>
    %3 = vector.shape_cast %2 : vector<1x8x8xf32> to vector<8x8xf32>
    %c0_5 = arith.constant 0 : index
    %c0_6 = arith.constant 0 : index
    %4 = vector.load %arg3[%c0_5, %c0_6] : memref<32x96xf32, #tpu.memory_space<vmem>>, vector<32x96xf32>
    %cst = arith.constant dense<0.000000e+00> : vector<8x96xf32>
    %5 = tpu.matmul %1, %4, %cst {dimension_numbers = #tpu.dot_dimension_numbers<[1], [0], [0], [1], [0, 0, 1, 1], [], []>} : vector<8x32xf32>, vector<32x96xf32>, vector<8x96xf32> -> vector<8x96xf32>
    %c0_7 = arith.constant 0 : index
    %c0_8 = arith.constant 0 : index
    %6 = vector.load %arg4[%c0_7, %c0_8] : memref<1x96xf32, #tpu.memory_space<vmem>>, vector<1x96xf32>
    %7 = vector.broadcast %6 : vector<1x96xf32> to vector<8x96xf32>
    %8 = arith.addf %5, %7 : vector<8x96xf32>
    %9 = vector.extract_strided_slice %8 {offsets = [0, 0], sizes = [8, 8], strides = [1, 1]} : vector<8x96xf32> to vector<8x8xf32>
    %10 = vector.extract_strided_slice %8 {offsets = [0, 32], sizes = [8, 8], strides = [1, 1]} : vector<8x96xf32> to vector<8x8xf32>
    %11 = vector.extract_strided_slice %8 {offsets = [0, 64], sizes = [8, 8], strides = [1, 1]} : vector<8x96xf32> to vector<8x8xf32>
    %cst_9 = arith.constant dense<0.000000e+00> : vector<8x8xf32>
    %12 = tpu.matmul %9, %10, %cst_9 {dimension_numbers = #tpu.dot_dimension_numbers<[1], [1], [0], [0], [0, 0, 1, 0], [], []>} : vector<8x8xf32>, vector<8x8xf32>, vector<8x8xf32> -> vector<8x8xf32>
    %13 = arith.addf %12, %3 : vector<8x8xf32>
    %cst_10 = arith.constant dense<0xFF800000> : vector<8xf32>
    %14 = vector.multi_reduction <maximumf>, %13, %cst_10 [1] : vector<8x8xf32> to vector<8xf32>
    %15 = vector.shape_cast %14 : vector<8xf32> to vector<8x1xf32>
    %16 = vector.broadcast %15 : vector<8x1xf32> to vector<8x8xf32>
    %17 = arith.subf %13, %16 : vector<8x8xf32>
    %18 = math.exp %17 : vector<8x8xf32>
    %cst_11 = arith.constant dense<0.000000e+00> : vector<8xf32>
    %19 = vector.multi_reduction <add>, %18, %cst_11 [1] : vector<8x8xf32> to vector<8xf32>
    %20 = vector.shape_cast %19 : vector<8xf32> to vector<8x1xf32>
    %21 = vector.broadcast %20 : vector<8x1xf32> to vector<8x8xf32>
    %22 = arith.divf %18, %21 : vector<8x8xf32>
    %cst_12 = arith.constant dense<0.000000e+00> : vector<8x8xf32>
    %23 = tpu.matmul %11, %22, %cst_12 {dimension_numbers = #tpu.dot_dimension_numbers<[0], [1], [1], [0], [0, 1, 1, 0], [], []>} : vector<8x8xf32>, vector<8x8xf32>, vector<8x8xf32> -> vector<8x8xf32>
    %c0_13 = arith.constant 0 : index
    %c0_14 = arith.constant 0 : index
    %c0_15 = arith.constant 0 : index
    %24 = vector.load %arg5[%c0_13, %c0_14, %c0_15] : memref<1x32x8xf32, #tpu.memory_space<vmem>>, vector<1x8x8xf32>
    %25 = vector.shape_cast %24 : vector<1x8x8xf32> to vector<8x8xf32>
    %26 = vector.shape_cast %23 : vector<8x8xf32> to vector<1x8x8xf32>
    tpu.vector_store %arg5[%c0_13, %c0_14, %c0_15], %26 {strides = array<i32>} : memref<1x32x8xf32, #tpu.memory_space<vmem>>, vector<1x8x8xf32>,
    %27 = vector.extract_strided_slice %8 {offsets = [0, 8], sizes = [8, 8], strides = [1, 1]} : vector<8x96xf32> to vector<8x8xf32>
    %28 = vector.extract_strided_slice %8 {offsets = [0, 40], sizes = [8, 8], strides = [1, 1]} : vector<8x96xf32> to vector<8x8xf32>
    %29 = vector.extract_strided_slice %8 {offsets = [0, 72], sizes = [8, 8], strides = [1, 1]} : vector<8x96xf32> to vector<8x8xf32>
    %cst_16 = arith.constant dense<0.000000e+00> : vector<8x8xf32>
    %30 = tpu.matmul %27, %28, %cst_16 {dimension_numbers = #tpu.dot_dimension_numbers<[1], [1], [0], [0], [0, 0, 1, 0], [], []>} : vector<8x8xf32>, vector<8x8xf32>, vector<8x8xf32> -> vector<8x8xf32>
    %31 = arith.addf %30, %3 : vector<8x8xf32>
    %cst_17 = arith.constant dense<0xFF800000> : vector<8xf32>
    %32 = vector.multi_reduction <maximumf>, %31, %cst_17 [1] : vector<8x8xf32> to vector<8xf32>
    %33 = vector.shape_cast %32 : vector<8xf32> to vector<8x1xf32>
    %34 = vector.broadcast %33 : vector<8x1xf32> to vector<8x8xf32>
    %35 = arith.subf %31, %34 : vector<8x8xf32>
    %36 = math.exp %35 : vector<8x8xf32>
    %cst_18 = arith.constant dense<0.000000e+00> : vector<8xf32>
    %37 = vector.multi_reduction <add>, %36, %cst_18 [1] : vector<8x8xf32> to vector<8xf32>
    %38 = vector.shape_cast %37 : vector<8xf32> to vector<8x1xf32>
    %39 = vector.broadcast %38 : vector<8x1xf32> to vector<8x8xf32>
    %40 = arith.divf %36, %39 : vector<8x8xf32>
    %cst_19 = arith.constant dense<0.000000e+00> : vector<8x8xf32>
    %41 = tpu.matmul %29, %40, %cst_19 {dimension_numbers = #tpu.dot_dimension_numbers<[0], [1], [1], [0], [0, 1, 1, 0], [], []>} : vector<8x8xf32>, vector<8x8xf32>, vector<8x8xf32> -> vector<8x8xf32>
    %c0_20 = arith.constant 0 : index
    %c8 = arith.constant 8 : index
    %c0_21 = arith.constant 0 : index
    %42 = vector.load %arg5[%c0_20, %c8, %c0_21] : memref<1x32x8xf32, #tpu.memory_space<vmem>>, vector<1x8x8xf32>
    %43 = vector.shape_cast %42 : vector<1x8x8xf32> to vector<8x8xf32>
    %44 = vector.shape_cast %41 : vector<8x8xf32> to vector<1x8x8xf32>
    tpu.vector_store %arg5[%c0_20, %c8, %c0_21], %44 {strides = array<i32>} : memref<1x32x8xf32, #tpu.memory_space<vmem>>, vector<1x8x8xf32>,
    %45 = vector.extract_strided_slice %8 {offsets = [0, 16], sizes = [8, 8], strides = [1, 1]} : vector<8x96xf32> to vector<8x8xf32>
    %46 = vector.extract_strided_slice %8 {offsets = [0, 48], sizes = [8, 8], strides = [1, 1]} : vector<8x96xf32> to vector<8x8xf32>
    %47 = vector.extract_strided_slice %8 {offsets = [0, 80], sizes = [8, 8], strides = [1, 1]} : vector<8x96xf32> to vector<8x8xf32>
    %cst_22 = arith.constant dense<0.000000e+00> : vector<8x8xf32>
    %48 = tpu.matmul %45, %46, %cst_22 {dimension_numbers = #tpu.dot_dimension_numbers<[1], [1], [0], [0], [0, 0, 1, 0], [], []>} : vector<8x8xf32>, vector<8x8xf32>, vector<8x8xf32> -> vector<8x8xf32>
    %49 = arith.addf %48, %3 : vector<8x8xf32>
    %cst_23 = arith.constant dense<0xFF800000> : vector<8xf32>
    %50 = vector.multi_reduction <maximumf>, %49, %cst_23 [1] : vector<8x8xf32> to vector<8xf32>
    %51 = vector.shape_cast %50 : vector<8xf32> to vector<8x1xf32>
    %52 = vector.broadcast %51 : vector<8x1xf32> to vector<8x8xf32>
    %53 = arith.subf %49, %52 : vector<8x8xf32>
    %54 = math.exp %53 : vector<8x8xf32>
    %cst_24 = arith.constant dense<0.000000e+00> : vector<8xf32>
    %55 = vector.multi_reduction <add>, %54, %cst_24 [1] : vector<8x8xf32> to vector<8xf32>
    %56 = vector.shape_cast %55 : vector<8xf32> to vector<8x1xf32>
    %57 = vector.broadcast %56 : vector<8x1xf32> to vector<8x8xf32>
    %58 = arith.divf %54, %57 : vector<8x8xf32>
    %cst_25 = arith.constant dense<0.000000e+00> : vector<8x8xf32>
    %59 = tpu.matmul %47, %58, %cst_25 {dimension_numbers = #tpu.dot_dimension_numbers<[0], [1], [1], [0], [0, 1, 1, 0], [], []>} : vector<8x8xf32>, vector<8x8xf32>, vector<8x8xf32> -> vector<8x8xf32>
    %c0_26 = arith.constant 0 : index
    %c16 = arith.constant 16 : index
    %c0_27 = arith.constant 0 : index
    %60 = vector.load %arg5[%c0_26, %c16, %c0_27] : memref<1x32x8xf32, #tpu.memory_space<vmem>>, vector<1x8x8xf32>
    %61 = vector.shape_cast %60 : vector<1x8x8xf32> to vector<8x8xf32>
    %62 = vector.shape_cast %59 : vector<8x8xf32> to vector<1x8x8xf32>
    tpu.vector_store %arg5[%c0_26, %c16, %c0_27], %62 {strides = array<i32>} : memref<1x32x8xf32, #tpu.memory_space<vmem>>, vector<1x8x8xf32>,
    %63 = vector.extract_strided_slice %8 {offsets = [0, 24], sizes = [8, 8], strides = [1, 1]} : vector<8x96xf32> to vector<8x8xf32>
    %64 = vector.extract_strided_slice %8 {offsets = [0, 56], sizes = [8, 8], strides = [1, 1]} : vector<8x96xf32> to vector<8x8xf32>
    %65 = vector.extract_strided_slice %8 {offsets = [0, 88], sizes = [8, 8], strides = [1, 1]} : vector<8x96xf32> to vector<8x8xf32>
    %cst_28 = arith.constant dense<0.000000e+00> : vector<8x8xf32>
    %66 = tpu.matmul %63, %64, %cst_28 {dimension_numbers = #tpu.dot_dimension_numbers<[1], [1], [0], [0], [0, 0, 1, 0], [], []>} : vector<8x8xf32>, vector<8x8xf32>, vector<8x8xf32> -> vector<8x8xf32>
    %67 = arith.addf %66, %3 : vector<8x8xf32>
    %cst_29 = arith.constant dense<0xFF800000> : vector<8xf32>
    %68 = vector.multi_reduction <maximumf>, %67, %cst_29 [1] : vector<8x8xf32> to vector<8xf32>
    %69 = vector.shape_cast %68 : vector<8xf32> to vector<8x1xf32>
    %70 = vector.broadcast %69 : vector<8x1xf32> to vector<8x8xf32>
    %71 = arith.subf %67, %70 : vector<8x8xf32>
    %72 = math.exp %71 : vector<8x8xf32>
    %cst_30 = arith.constant dense<0.000000e+00> : vector<8xf32>
    %73 = vector.multi_reduction <add>, %72, %cst_30 [1] : vector<8x8xf32> to vector<8xf32>
    %74 = vector.shape_cast %73 : vector<8xf32> to vector<8x1xf32>
    %75 = vector.broadcast %74 : vector<8x1xf32> to vector<8x8xf32>
    %76 = arith.divf %72, %75 : vector<8x8xf32>
    %cst_31 = arith.constant dense<0.000000e+00> : vector<8x8xf32>
    %77 = tpu.matmul %65, %76, %cst_31 {dimension_numbers = #tpu.dot_dimension_numbers<[0], [1], [1], [0], [0, 1, 1, 0], [], []>} : vector<8x8xf32>, vector<8x8xf32>, vector<8x8xf32> -> vector<8x8xf32>
    %c0_32 = arith.constant 0 : index
    %c24 = arith.constant 24 : index
    %c0_33 = arith.constant 0 : index
    %78 = vector.load %arg5[%c0_32, %c24, %c0_33] : memref<1x32x8xf32, #tpu.memory_space<vmem>>, vector<1x8x8xf32>
    %79 = vector.shape_cast %78 : vector<1x8x8xf32> to vector<8x8xf32>
    %80 = vector.shape_cast %77 : vector<8x8xf32> to vector<1x8x8xf32>
    tpu.vector_store %arg5[%c0_32, %c24, %c0_33], %80 {strides = array<i32>} : memref<1x32x8xf32, #tpu.memory_space<vmem>>, vector<1x8x8xf32>,
    return
  }
  func.func @transform_0(%arg0: i32) -> (i32, i32, i32) {
    %c0_i32 = arith.constant 0 : i32
    %c0_i32_0 = arith.constant 0 : i32
    %c0_i32_1 = arith.constant 0 : i32
    return %arg0, %c0_i32, %c0_i32_0 : i32, i32, i32
  }
  func.func @transform_1(%arg0: i32) -> (i32, i32, i32) {
    %c0_i32 = arith.constant 0 : i32
    %c0_i32_0 = arith.constant 0 : i32
    %c0_i32_1 = arith.constant 0 : i32
    %c0_i32_2 = arith.constant 0 : i32
    return %c0_i32, %c0_i32_0, %c0_i32_1 : i32, i32, i32
  }
  func.func @transform_2(%arg0: i32) -> (i32, i32) {
    %c0_i32 = arith.constant 0 : i32
    %c0_i32_0 = arith.constant 0 : i32
    %c0_i32_1 = arith.constant 0 : i32
    return %c0_i32, %c0_i32_0 : i32, i32
  }
  func.func @transform_3(%arg0: i32) -> (i32, i32) {
    %c0_i32 = arith.constant 0 : i32
    %c0_i32_0 = arith.constant 0 : i32
    %c0_i32_1 = arith.constant 0 : i32
    return %c0_i32, %c0_i32_0 : i32, i32
  }
  func.func @transform_4(%arg0: i32) -> (i32, i32, i32) {
    %c0_i32 = arith.constant 0 : i32
    %c0_i32_0 = arith.constant 0 : i32
    %c0_i32_1 = arith.constant 0 : i32
    return %arg0, %c0_i32, %c0_i32_0 : i32, i32, i32
  }
}

</mosaic_0001>

<llo_original>
// kernel: tpu_custom_call.1
$region0: #{tpu_custom_call.1}
  #allocation0 [shape = 'u32[]', space=smem, size = 0x4, offset = 0x4, fixed_abs, tag = 'smem constant byte address 0x4 - core index']
  #allocation1 [shape = 'u32[144,128]{1,0:T(1,128)}', space=vmem, size = 0x12000, scoped, tag = 'internal scratch']
  %s0 = inlined_call_operand.hbm [shape: f32[2,8,32], index: 0, kind: input, shape index: {}]
  %s1 = inlined_call_operand.hbm [shape: f32[1,8,8], index: 1, kind: input, shape index: {}]
  %s2 = inlined_call_operand.hbm [shape: f32[32,96], index: 2, kind: input, shape index: {}]
  %s3 = inlined_call_operand.vmem [shape: f32[1,96], index: 3, kind: input, shape index: {}]
  %s4 = inlined_call_operand.vmem [shape: f32[2,32,8], index: 4, kind: output, shape index: {}]
  %s5 = sld [smem:[#allocation0]]
  $region61: #{tpu_custom_call.1} parent=0
    _
  %s7 = ssub.s32 1, %s5
  %s8 = scalar_select 0, %s7, %s5
  $region1: #{tpu_custom_call.1} parent=0
    #allocation2 [shape = 'u8[8192]{0}', space=vmem, size = 0x2000, scoped, tag = 'input window, operand 0']
    #allocation3 [shape = 's32[2]{0}', space=sflag, size = 0x8, scoped, tag = 'scoped memory for tpu_custom_call.1']
    #allocation4 [shape = 'u8[4096]{0}', space=vmem, size = 0x1000, scoped, tag = 'input window, operand 1, single buffered']
    #allocation5 [shape = 's32[1]{0}', space=sflag, size = 0x4, scoped, tag = 'scoped memory for tpu_custom_call.1']
    #allocation6 [shape = 'u8[16384]{0}', space=vmem, size = 0x4000, scoped, tag = 'input window, operand 2, single buffered']
    %9 = vsyncpa [#allocation3], 0
    %s10 = scalar_lea.sflag [#allocation3], 1
    %11 = vsyncpa %s10, 0
    %12 = vsyncpa [#allocation5], 0
    loop: start=0, step=1, limit=4
    $region2: #{tpu_custom_call.1} parent=1 // loop_pre_header
      _
    $region3: #{tpu_custom_call.1} parent=1 // loop_header
      %s14 = sphi 0, %s18
      %p15 = scmp.ge.s32.totalorder %s14, 4
      %s24 = sphi 0, %s26
      %s27 = sphi 0, %s24
      %s28 = sphi 0, %s27
      %s44 = sphi 0, %s28
      %s48 = sphi 0, %s48
      %s50 = sphi 0, %s48
      %s51 = sphi 0, %s50
      %s65 = sphi 0, %s51
      %s69 = sphi 0, %s69
      %s71 = sphi 0, %s69
      %s72 = sphi 0, %s71
      %s86 = sphi 0, %s72
      %s90 = sphi 0, %s90
      %s92 = sphi 0, %s90
      %s93 = sphi 0, %s92
      %s107 = sphi 0, %s93
      %s113 = sphi 0, %s115
      %s116 = sphi 0, %s113
      %s117 = sphi 0, %s116
      %s133 = sphi 0, %s117
    $region4: #{tpu_custom_call.1} parent=1 // loop_header_branch
      %17 = sbr.rel (%p15) target = $region8
    $region5: #{tpu_custom_call.1} parent=1 // loop_body
      %s19 = ssub.s32 %s14, 1
      %s20 = ssub.s32 %s14, 2
      %s21 = sadd.s32 %s14, 1
      %s22 = ssub.s32 %s14, %s21
      %p23 = scmp.eq.s32.totalorder %s22, 0
      %s25 = sadd.s32 %s24, 1
      %s26 = scalar_select %p23, %s24, %s25
      %p29 = pneg %p23
      %p30 = scmp.eq.s32.totalorder %s14, 1
      %p31 = por %p29, %p30
      %p32 = scmp.ne.s32.totalorder %s24, %s27
      %p33 = scmp.eq.s32.totalorder %s14, 0
      %p34 = por %p32, %p33
      %p35 = scmp.ne.s32.totalorder %s24, %s27
      %p36 = scmp.eq.s32.totalorder %s19, 1
      %p37 = por %p35, %p36
      %p38 = scmp.ne.s32.totalorder %s27, %s28
      %p39 = scmp.eq.s32.totalorder %s19, 0
      %p40 = por %p38, %p39
      %p41 = scmp.ne.s32.totalorder %s27, %s28
      %p42 = scmp.eq.s32.totalorder %s20, 1
      %p43 = por %p41, %p42
      %p45 = scmp.ne.s32.totalorder %s28, %s44
      %p46 = scmp.eq.s32.totalorder %s20, 0
      %p47 = por %p45, %p46
      %s49 = sadd.s32 %s48, 1
      %p52 = scmp.eq.s32.totalorder %s14, 1
      %p53 = scmp.ne.s32.totalorder %s48, %s50
      %p54 = scmp.eq.s32.totalorder %s14, 0
      %p55 = por %p53, %p54
      %p56 = scmp.ne.s32.totalorder %s48, %s50
      %p57 = scmp.eq.s32.totalorder %s19, 1
      %p58 = por %p56, %p57
      %p59 = scmp.ne.s32.totalorder %s50, %s51
      %p60 = scmp.eq.s32.totalorder %s19, 0
      %p61 = por %p59, %p60
      %p62 = scmp.ne.s32.totalorder %s50, %s51
      %p63 = scmp.eq.s32.totalorder %s20, 1
      %p64 = por %p62, %p63
      %p66 = scmp.ne.s32.totalorder %s51, %s65
      %p67 = scmp.eq.s32.totalorder %s20, 0
      %p68 = por %p66, %p67
      %s70 = sadd.s32 %s69, 1
      %p73 = scmp.eq.s32.totalorder %s14, 1
      %p74 = scmp.ne.s32.totalorder %s69, %s71
      %p75 = scmp.eq.s32.totalorder %s14, 0
      %p76 = por %p74, %p75
      %p77 = scmp.ne.s32.totalorder %s69, %s71
      %p78 = scmp.eq.s32.totalorder %s19, 1
      %p79 = por %p77, %p78
      %p80 = scmp.ne.s32.totalorder %s71, %s72
      %p81 = scmp.eq.s32.totalorder %s19, 0
      %p82 = por %p80, %p81
      %p83 = scmp.ne.s32.totalorder %s71, %s72
      %p84 = scmp.eq.s32.totalorder %s20, 1
      %p85 = por %p83, %p84
      %p87 = scmp.ne.s32.totalorder %s72, %s86
      %p88 = scmp.eq.s32.totalorder %s20, 0
      %p89 = por %p87, %p88
      %s91 = sadd.s32 %s90, 1
      %p94 = scmp.eq.s32.totalorder %s14, 1
      %p95 = scmp.ne.s32.totalorder %s90, %s92
      %p96 = scmp.eq.s32.totalorder %s14, 0
      %p97 = por %p95, %p96
      %p98 = scmp.ne.s32.totalorder %s90, %s92
      %p99 = scmp.eq.s32.totalorder %s19, 1
      %p100 = por %p98, %p99
      %p101 = scmp.ne.s32.totalorder %s92, %s93
      %p102 = scmp.eq.s32.totalorder %s19, 0
      %p103 = por %p101, %p102
      %p104 = scmp.ne.s32.totalorder %s92, %s93
      %p105 = scmp.eq.s32.totalorder %s20, 1
      %p106 = por %p104, %p105
      %p108 = scmp.ne.s32.totalorder %s93, %s107
      %p109 = scmp.eq.s32.totalorder %s20, 0
      %p110 = por %p108, %p109
      %s111 = ssub.s32 %s14, %s21
      %p112 = scmp.eq.s32.totalorder %s111, 0
      %s114 = sadd.s32 %s113, 1
      %s115 = scalar_select %p112, %s113, %s114
      %p118 = pneg %p112
      %p119 = scmp.eq.s32.totalorder %s14, 1
      %p120 = por %p118, %p119
      %p121 = scmp.ne.s32.totalorder %s113, %s116
      %p122 = scmp.eq.s32.totalorder %s14, 0
      %p123 = por %p121, %p122
      %p124 = scmp.ne.s32.totalorder %s113, %s116
      %p125 = scmp.eq.s32.totalorder %s19, 1
      %p126 = por %p124, %p125
      %p127 = scmp.ne.s32.totalorder %s116, %s117
      %p128 = scmp.eq.s32.totalorder %s19, 0
      %p129 = por %p127, %p128
      %p130 = scmp.ne.s32.totalorder %s116, %s117
      %p131 = scmp.eq.s32.totalorder %s20, 1
      %p132 = por %p130, %p131
      %p134 = scmp.ne.s32.totalorder %s117, %s133
      %p135 = scmp.eq.s32.totalorder %s20, 0
      %p136 = por %p134, %p135
      %p137 = scmp.le.s32.totalorder 1, %s14
      %p138 = scmp.lt.s32.totalorder %s14, 3
      %p139 = pnand %p137, %p138
      %p140 = pneg %p139
      // Predicated region
      $region9: #{tpu_custom_call.1} parent=5 // pred_check
        _
      $region10: #{tpu_custom_call.1} parent=5 // pred_check_branch
        %142 = sbr.rel (%p139) target = $region12
      $region11: #{tpu_custom_call.1} parent=5 // pred_region
        %s143 = ssub.s32 %s14, 1
        // Predicated region
        $region13: #{tpu_custom_call.1} parent=11 // pred_check
          %p144 = pneg %p61
        $region14: #{tpu_custom_call.1} parent=11 // pred_check_branch
          %146 = sbr.rel (%p144) target = $region16
        $region15: #{tpu_custom_call.1} parent=11 // pred_region
          %s148 = ssub.s32 128, 128
          %149 = vsyncadd [#allocation5], %s148
          %s151 = sshll.u32 [#allocation4], 4
          %s152 = int_to_ptr.vmem [resolvable:$true] %s151
          %154 = dma.hbm_to_vmem [thread:$0]  %s1, 128, %s152, [#allocation5]
        $region16: #{tpu_custom_call.1} parent=11 // pred_fallthru
          _
        // Predicated region
        $region17: #{tpu_custom_call.1} parent=11 // pred_check
          %p155 = pneg %p82
        $region18: #{tpu_custom_call.1} parent=11 // pred_check_branch
          %157 = sbr.rel (%p155) target = $region20
        $region19: #{tpu_custom_call.1} parent=11 // pred_region
          %s159 = ssub.s32 512, 512
          %160 = vsyncadd [#allocation5], %s159
          %s161 = sshll.u32 [#allocation6], 4
          %s162 = int_to_ptr.vmem [resolvable:$true] %s161
          %167 = dma.hbm_to_vmem [thread:$0]  %s2, 512, %s162, [#allocation5], 128, 128, 8
        $region20: #{tpu_custom_call.1} parent=11 // pred_fallthru
          _
        // Predicated region
        $region21: #{tpu_custom_call.1} parent=11 // pred_check
          %p168 = pneg %p103
        $region22: #{tpu_custom_call.1} parent=11 // pred_check_branch
          %170 = sbr.rel (%p168) target = $region24
        $region23: #{tpu_custom_call.1} parent=11 // pred_region
          _
        $region24: #{tpu_custom_call.1} parent=11 // pred_fallthru
          _
      $region12: #{tpu_custom_call.1} parent=5 // pred_fallthru
        _
      %p171 = scmp.lt.s32.totalorder %s14, 2
      // Predicated region
      $region25: #{tpu_custom_call.1} parent=5 // pred_check
        %p172 = pneg %p171
      $region26: #{tpu_custom_call.1} parent=5 // pred_check_branch
        %174 = sbr.rel (%p172) target = $region28
      $region27: #{tpu_custom_call.1} parent=5 // pred_region
        // Predicated region
        $region29: #{tpu_custom_call.1} parent=27 // pred_check
          %p175 = pneg %p34
        $region30: #{tpu_custom_call.1} parent=27 // pred_check_branch
          %177 = sbr.rel (%p175) target = $region32
        $region31: #{tpu_custom_call.1} parent=27 // pred_region
          %s178 = sand.u32 %s24, 1
          %s179 = scalar_lea.sflag [#allocation3], %s178
          %s180 = sand.u32 %s24, 1
          %s181 = smul.addr %s180, 8
          %s182 = scalar_lea.vmem [#allocation2], %s181
          %s184 = ssub.s32 128, 128
          %185 = vsyncadd %s179, %s184
          %s186 = smul.addr %s14, 128
          %s187 = scalar_lea.hbm %s0, %s186
          %s189 = sshll.u32 %s182, 4
          %s190 = int_to_ptr.vmem [resolvable:$true] %s189
          %192 = dma.hbm_to_vmem [thread:$0]  %s187, 128, %s190, %s179
        $region32: #{tpu_custom_call.1} parent=27 // pred_fallthru
          _
      $region28: #{tpu_custom_call.1} parent=5 // pred_fallthru
        _
      %p193 = scmp.le.s32.totalorder 1, %s14
      %p194 = scmp.lt.s32.totalorder %s14, 3
      %p195 = pnand %p193, %p194
      %p196 = pneg %p195
      // Predicated region
      $region33: #{tpu_custom_call.1} parent=5 // pred_check
        _
      $region34: #{tpu_custom_call.1} parent=5 // pred_check_branch
        %198 = sbr.rel (%p195) target = $region36
      $region35: #{tpu_custom_call.1} parent=5 // pred_region
        %s199 = ssub.s32 %s14, 1
        %s200 = sand.u32 %s27, 1
        %s201 = scalar_lea.sflag [#allocation3], %s200
        %s202 = sand.u32 %s27, 1
        %s203 = smul.addr %s202, 8
        %s204 = scalar_lea.vmem [#allocation2], %s203
        // Predicated region
        $region37: #{tpu_custom_call.1} parent=35 // pred_check
          %p205 = pneg %p40
        $region38: #{tpu_custom_call.1} parent=35 // pred_check_branch
          %207 = sbr.rel (%p205) target = $region40
        $region39: #{tpu_custom_call.1} parent=35 // pred_region
          %208 = dma.done %s201, 128
        $region40: #{tpu_custom_call.1} parent=35 // pred_fallthru
          _
        // Predicated region
        $region41: #{tpu_custom_call.1} parent=35 // pred_check
          %p209 = pneg %p61
        $region42: #{tpu_custom_call.1} parent=35 // pred_check_branch
          %211 = sbr.rel (%p209) target = $region44
        $region43: #{tpu_custom_call.1} parent=35 // pred_region
          %212 = dma.done [#allocation5], 128
        $region44: #{tpu_custom_call.1} parent=35 // pred_fallthru
          _
        // Predicated region
        $region45: #{tpu_custom_call.1} parent=35 // pred_check
          %p213 = pneg %p82
        $region46: #{tpu_custom_call.1} parent=35 // pred_check_branch
          %215 = sbr.rel (%p213) target = $region48
        $region47: #{tpu_custom_call.1} parent=35 // pred_region
          %216 = dma.done [#allocation5], 512
        $region48: #{tpu_custom_call.1} parent=35 // pred_fallthru
          _
        %s217 = sand.u32 %s27, 1
        %s218 = scalar_lea.sflag [#allocation3], %s217
        %s219 = sand.u32 %s27, 1
        %s220 = smul.addr %s219, 8
        %s221 = scalar_lea.vmem [#allocation2], %s220
        %p222 = pneg %p40
        %p223 = pneg %p37
        %p224 = pneg %p61
        %p225 = pneg %p58
        %p226 = pneg %p82
        %p227 = pneg %p79
        %p228 = pneg %p103
        %p229 = pneg %p100
        %p230 = pneg %p129
        %p231 = pneg %p126
        %p232 = scmp.lt.s32.totalorder %s19, 1
        %s233 = scalar_select %p232, %s19, 1
        %s234 = smul.addr %s233, 4
        %s235 = smul.addr %s234, 8
        %s236 = scalar_lea.vmem %s4, %s235
        %p237 = scmp.lt.s32.totalorder %s19, 1
        %s238 = scalar_select %p237, %s19, 1
        %s239 = smul.addr %s238, 4
        %s240 = smul.addr %s239, 8
        %s241 = scalar_lea.vmem %s4, %s240
        %v242 = vld [vmem:[%s204] sm:$0xff]
        %v243 = vld [vmem:[#allocation4] sm:$0xff]
        %v244 = vld [vmem:[#allocation6] sm:$0xff]
        %v245 = vld [vmem:[#allocation6 + $0x8] sm:$0xff]
        %v246 = vld [vmem:[#allocation6 + $0x10] sm:$0xff]
        %v247 = vld [vmem:[#allocation6 + $0x18] sm:$0xff]
        %v248 = vld [vmem:[%s3] sm:$0x1]
        %v250 = vlaneseq
        %v251 = vshrl.u32 %v250, 7
        %v252 = vsub.s32 0, %v251
        %v253 = vrot.slane %v248, %v252
        %vm255 = vcmask 261120
        %v257 = vsel %vm255, %v242, 0
        %259 = vmatprep.subr.mxu0 0.0
        %260 = vmatpush1.msra.mxu0 0.0
        %261 = vmatprep.subr.mxu0 0.0
        %262 = vmatpush1.msra.mxu0 0.0
        %263 = vmatprep.subr.mxu0 0.0
        %264 = vmatpush1.msra.mxu0 0.0
        %265 = vmatprep.subr.mxu0 0.0
        %266 = vmatpush1.msra.mxu0 0.0
        %267 = vmatprep.subr.mxu0 0.0
        %268 = vmatpush1.msra.mxu0 0.0
        %269 = vmatprep.subr.mxu0 0.0
        %270 = vmatpush1.msra.mxu0 0.0
        %271 = vmatprep.subr.mxu0 0.0
        %272 = vmatpush1.msra.mxu0 0.0
        %273 = vmatprep.subr.mxu0 0.0
        %274 = vmatpush1.msra.mxu0 0.0
        %275 = vmatprep.subr.mxu0 0.0
        %276 = vmatpush1.msra.mxu0 0.0
        %277 = vmatprep.subr.mxu0 0.0
        %278 = vmatpush1.msra.mxu0 0.0
        %279 = vmatprep.subr.mxu0 0.0
        %280 = vmatpush1.msra.mxu0 0.0
        %281 = vmatprep.subr.mxu0 0.0
        %282 = vmatpush1.msra.mxu0 0.0
        %283 = vmatprep.subr.mxu0 0.0
        %284 = vmatpush1.msra.mxu0 %v247
        %285 = vmatprep.subr.mxu0 0.0
        %286 = vmatpush1.msra.mxu0 %v246
        %287 = vmatprep.subr.mxu0 0.0
        %288 = vmatpush1.msra.mxu0 %v245
        %289 = vmatprep.subr.mxu0 0.0
        %290 = vmatpush1.msra.mxu0 %v244
        %291 = vmatprep.subr.mxu0 0.0
        %292 = vmatpush2.msra.mxu0 0.0
        %293 = vmatprep.subr.mxu0 0.0
        %294 = vmatpush2.msra.mxu0 0.0
        %295 = vmatprep.subr.mxu0 0.0
        %296 = vmatpush2.msra.mxu0 0.0
        %297 = vmatprep.subr.mxu0 0.0
        %298 = vmatpush2.msra.mxu0 0.0
        %299 = vmatprep.subr.mxu0 0.0
        %300 = vmatpush2.msra.mxu0 0.0
        %301 = vmatprep.subr.mxu0 0.0
        %302 = vmatpush2.msra.mxu0 0.0
        %303 = vmatprep.subr.mxu0 0.0
        %304 = vmatpush2.msra.mxu0 0.0
        %305 = vmatprep.subr.mxu0 0.0
        %306 = vmatpush2.msra.mxu0 0.0
        %307 = vmatprep.subr.mxu0 0.0
        %308 = vmatpush2.msra.mxu0 0.0
        %309 = vmatprep.subr.mxu0 0.0
        %310 = vmatpush2.msra.mxu0 0.0
        %311 = vmatprep.subr.mxu0 0.0
        %312 = vmatpush2.msra.mxu0 0.0
        %313 = vmatprep.subr.mxu0 0.0
        %314 = vmatpush2.msra.mxu0 0.0
        %315 = vmatprep.subr.mxu0 0.0
        %316 = vmatpush2.msra.mxu0 0.0
        %317 = vmatprep.subr.mxu0 0.0
        %318 = vmatpush2.msra.mxu0 0.0
        %319 = vmatprep.subr.mxu0 0.0
        %320 = vmatpush2.msra.mxu0 0.0
        %321 = vmatprep.subr.mxu0 0.0
        %322 = vmatpush2.msra.mxu0 0.0
        %323 = vmatprep.mubr.f32.mxu0 0.0
        %324 = vmatmul.mubr.f32.gmra.mxu0 %v257
        %v325 = vpop.f32.mrf.mxu0
        %v326 = vadd.f32 %v253, %v325
        %v327 = vpop.f32.mrf.mxu0
        %328 = vdwg.mxu0
        %330 = vrot.lane.b32.xlu0 %v326, 96
        %v331 = vpop.permute.xlu0 %330
        %vm332 = vcmask 64512
        %v333 = vsel %vm332, %v326, 0
        %v335 = vsel %vm332, %v331, 0
        %337 = vmatprep.subr.mxu0 0.0
        %338 = vmatpush1.xpose.msra.mxu0 0.0
        %339 = vmatprep.subr.mxu0 0.0
        %340 = vmatpush1.xpose.msra.mxu0 0.0
        %341 = vmatprep.subr.mxu0 0.0
        %342 = vmatpush1.xpose.msra.mxu0 0.0
        %343 = vmatprep.subr.mxu0 0.0
        %344 = vmatpush1.xpose.msra.mxu0 0.0
        %345 = vmatprep.subr.mxu0 0.0
        %346 = vmatpush1.xpose.msra.mxu0 0.0
        %347 = vmatprep.subr.mxu0 0.0
        %348 = vmatpush1.xpose.msra.mxu0 0.0
        %349 = vmatprep.subr.mxu0 0.0
        %350 = vmatpush1.xpose.msra.mxu0 0.0
        %351 = vmatprep.subr.mxu0 0.0
        %352 = vmatpush1.xpose.msra.mxu0 0.0
        %353 = vmatprep.subr.mxu0 0.0
        %354 = vmatpush1.xpose.msra.mxu0 0.0
        %355 = vmatprep.subr.mxu0 0.0
        %356 = vmatpush1.xpose.msra.mxu0 0.0
        %357 = vmatprep.subr.mxu0 0.0
        %358 = vmatpush1.xpose.msra.mxu0 0.0
        %359 = vmatprep.subr.mxu0 0.0
        %360 = vmatpush1.xpose.msra.mxu0 0.0
        %361 = vmatprep.subr.mxu0 0.0
        %362 = vmatpush1.xpose.msra.mxu0 0.0
        %363 = vmatprep.subr.mxu0 0.0
        %364 = vmatpush1.xpose.msra.mxu0 0.0
        %365 = vmatprep.subr.mxu0 0.0
        %366 = vmatpush1.xpose.msra.mxu0 0.0
        %367 = vmatprep.subr.mxu0 0.0
        %368 = vmatpush1.xpose.msra.mxu0 %v335
        %369 = vmatprep.subr.mxu0 0.0
        %370 = vmatpush2.xpose.msra.mxu0 0.0
        %371 = vmatprep.subr.mxu0 0.0
        %372 = vmatpush2.xpose.msra.mxu0 0.0
        %373 = vmatprep.subr.mxu0 0.0
        %374 = vmatpush2.xpose.msra.mxu0 0.0
        %375 = vmatprep.subr.mxu0 0.0
        %376 = vmatpush2.xpose.msra.mxu0 0.0
        %377 = vmatprep.subr.mxu0 0.0
        %378 = vmatpush2.xpose.msra.mxu0 0.0
        %379 = vmatprep.subr.mxu0 0.0
        %380 = vmatpush2.xpose.msra.mxu0 0.0
        %381 = vmatprep.subr.mxu0 0.0
        %382 = vmatpush2.xpose.msra.mxu0 0.0
        %383 = vmatprep.subr.mxu0 0.0
        %384 = vmatpush2.xpose.msra.mxu0 0.0
        %385 = vmatprep.subr.mxu0 0.0
        %386 = vmatpush2.xpose.msra.mxu0 0.0
        %387 = vmatprep.subr.mxu0 0.0
        %388 = vmatpush2.xpose.msra.mxu0 0.0
        %389 = vmatprep.subr.mxu0 0.0
        %390 = vmatpush2.xpose.msra.mxu0 0.0
        %391 = vmatprep.subr.mxu0 0.0
        %392 = vmatpush2.xpose.msra.mxu0 0.0
        %393 = vmatprep.subr.mxu0 0.0
        %394 = vmatpush2.xpose.msra.mxu0 0.0
        %395 = vmatprep.subr.mxu0 0.0
        %396 = vmatpush2.xpose.msra.mxu0 0.0
        %397 = vmatprep.subr.mxu0 0.0
        %398 = vmatpush2.xpose.msra.mxu0 0.0
        %399 = vmatprep.subr.mxu0 0.0
        %400 = vmatpush2.xpose.msra.mxu0 0.0
        %401 = vmatprep.mubr.f32.mxu0 0.0
        %402 = vmatmul.mubr.f32.gmra.mxu0 %v333
        %v403 = vpop.f32.mrf.mxu0
        %v404 = vadd.f32 %v243, %v403
        %v405 = vpop.f32.mrf.mxu0
        %406 = vdwg.mxu0
        %v407 = vsel %vm332, %v404, -inf
        %408 = vmax.xlane.f32.xlu0 %v407
        %v409 = vpop.xlane.xlu0 %408
        %v410 = vsub.f32 %v404, %v409
        %v411 = vmul.f32 %v410, 1.442695
        %v412 = vpow.pop %v411
        %v413 = vsel %vm332, %v412, 0.0
        %414 = vadd.xlane.f32.xlu0 %v413
        %v415 = vpop.xlane.xlu0 %414
        %v416 = vrcp.pop %v415
        %v417 = vmul.f32 %v412, %v416
        %418 = vrot.lane.b32.xlu0 %v326, 64
        %v419 = vpop.permute.xlu0 %418
        %421 = vxpose.xlu0.b32.start [1/16] %v419, 128
        %422 = vxpose.xlu0.b32.cont [2/16] 0.0, 128
        %423 = vxpose.xlu0.b32.cont [3/16] 0.0, 128
        %424 = vxpose.xlu0.b32.cont [4/16] 0.0, 128
        %425 = vxpose.xlu0.b32.cont [5/16] 0.0, 128
        %426 = vxpose.xlu0.b32.cont [6/16] 0.0, 128
        %427 = vxpose.xlu0.b32.cont [7/16] 0.0, 128
        %428 = vxpose.xlu0.b32.cont [8/16] 0.0, 128
        %429 = vxpose.xlu0.b32.cont [9/16] 0.0, 128
        %430 = vxpose.xlu0.b32.cont [10/16] 0.0, 128
        %431 = vxpose.xlu0.b32.cont [11/16] 0.0, 128
        %432 = vxpose.xlu0.b32.cont [12/16] 0.0, 128
        %433 = vxpose.xlu0.b32.cont [13/16] 0.0, 128
        %434 = vxpose.xlu0.b32.cont [14/16] 0.0, 128
        %435 = vxpose.xlu0.b32.cont [15/16] 0.0, 128
        %436 = vxpose.xlu0.b32.end [16/16] 0.0, 128
        %v437 = vpop.trf.xlu0
        %v438 = vpop.trf.xlu0
        %v439 = vpop.trf.xlu0
        %v440 = vpop.trf.xlu0
        %v441 = vpop.trf.xlu0
        %v442 = vpop.trf.xlu0
        %v443 = vpop.trf.xlu0
        %v444 = vpop.trf.xlu0
        %v445 = vpop.trf.xlu0
        %v446 = vpop.trf.xlu0
        %v447 = vpop.trf.xlu0
        %v448 = vpop.trf.xlu0
        %v449 = vpop.trf.xlu0
        %v450 = vpop.trf.xlu0
        %v451 = vpop.trf.xlu0
        %v452 = vpop.trf.xlu0
        %v454 = vsel %vm332, %v437, 0
        %v457 = vsel %vm332, %v417, 0
        %459 = vmatprep.subr.mxu0 0.0
        %460 = vmatpush1.xpose.msra.mxu0 0.0
        %461 = vmatprep.subr.mxu0 0.0
        %462 = vmatpush1.xpose.msra.mxu0 0.0
        %463 = vmatprep.subr.mxu0 0.0
        %464 = vmatpush1.xpose.msra.mxu0 0.0
        %465 = vmatprep.subr.mxu0 0.0
        %466 = vmatpush1.xpose.msra.mxu0 0.0
        %467 = vmatprep.subr.mxu0 0.0
        %468 = vmatpush1.xpose.msra.mxu0 0.0
        %469 = vmatprep.subr.mxu0 0.0
        %470 = vmatpush1.xpose.msra.mxu0 0.0
        %471 = vmatprep.subr.mxu0 0.0
        %472 = vmatpush1.xpose.msra.mxu0 0.0
        %473 = vmatprep.subr.mxu0 0.0
        %474 = vmatpush1.xpose.msra.mxu0 0.0
        %475 = vmatprep.subr.mxu0 0.0
        %476 = vmatpush1.xpose.msra.mxu0 0.0
        %477 = vmatprep.subr.mxu0 0.0
        %478 = vmatpush1.xpose.msra.mxu0 0.0
        %479 = vmatprep.subr.mxu0 0.0
        %480 = vmatpush1.xpose.msra.mxu0 0.0
        %481 = vmatprep.subr.mxu0 0.0
        %482 = vmatpush1.xpose.msra.mxu0 0.0
        %483 = vmatprep.subr.mxu0 0.0
        %484 = vmatpush1.xpose.msra.mxu0 0.0
        %485 = vmatprep.subr.mxu0 0.0
        %486 = vmatpush1.xpose.msra.mxu0 0.0
        %487 = vmatprep.subr.mxu0 0.0
        %488 = vmatpush1.xpose.msra.mxu0 0.0
        %489 = vmatprep.subr.mxu0 0.0
        %490 = vmatpush1.xpose.msra.mxu0 %v457
        %491 = vmatprep.subr.mxu0 0.0
        %492 = vmatpush2.xpose.msra.mxu0 0.0
        %493 = vmatprep.subr.mxu0 0.0
        %494 = vmatpush2.xpose.msra.mxu0 0.0
        %495 = vmatprep.subr.mxu0 0.0
        %496 = vmatpush2.xpose.msra.mxu0 0.0
        %497 = vmatprep.subr.mxu0 0.0
        %498 = vmatpush2.xpose.msra.mxu0 0.0
        %499 = vmatprep.subr.mxu0 0.0
        %500 = vmatpush2.xpose.msra.mxu0 0.0
        %501 = vmatprep.subr.mxu0 0.0
        %502 = vmatpush2.xpose.msra.mxu0 0.0
        %503 = vmatprep.subr.mxu0 0.0
        %504 = vmatpush2.xpose.msra.mxu0 0.0
        %505 = vmatprep.subr.mxu0 0.0
        %506 = vmatpush2.xpose.msra.mxu0 0.0
        %507 = vmatprep.subr.mxu0 0.0
        %508 = vmatpush2.xpose.msra.mxu0 0.0
        %509 = vmatprep.subr.mxu0 0.0
        %510 = vmatpush2.xpose.msra.mxu0 0.0
        %511 = vmatprep.subr.mxu0 0.0
        %512 = vmatpush2.xpose.msra.mxu0 0.0
        %513 = vmatprep.subr.mxu0 0.0
        %514 = vmatpush2.xpose.msra.mxu0 0.0
        %515 = vmatprep.subr.mxu0 0.0
        %516 = vmatpush2.xpose.msra.mxu0 0.0
        %517 = vmatprep.subr.mxu0 0.0
        %518 = vmatpush2.xpose.msra.mxu0 0.0
        %519 = vmatprep.subr.mxu0 0.0
        %520 = vmatpush2.xpose.msra.mxu0 0.0
        %521 = vmatprep.subr.mxu0 0.0
        %522 = vmatpush2.xpose.msra.mxu0 0.0
        %523 = vmatprep.mubr.f32.mxu0 0.0
        %524 = vmatmul.mubr.f32.gmra.mxu0 %v454
        %v525 = vpop.f32.mrf.mxu0
        %v526 = vadd.f32 0.0, %v525
        %v527 = vpop.f32.mrf.mxu0
        %528 = vdwg.mxu0
        %529 = vst.msk [vmem:[%s241] sm:$0xff] %vm332, %v526
        %530 = vrot.lane.b32.xlu0 %v326, 120
        %v531 = vpop.permute.xlu0 %530
        %532 = vrot.lane.b32.xlu0 %v326, 88
        %v533 = vpop.permute.xlu0 %532
        %v534 = vsel %vm332, %v531, 0
        %v536 = vsel %vm332, %v533, 0
        %538 = vmatprep.subr.mxu0 0.0
        %539 = vmatpush1.xpose.msra.mxu0 0.0
        %540 = vmatprep.subr.mxu0 0.0
        %541 = vmatpush1.xpose.msra.mxu0 0.0
        %542 = vmatprep.subr.mxu0 0.0
        %543 = vmatpush1.xpose.msra.mxu0 0.0
        %544 = vmatprep.subr.mxu0 0.0
        %545 = vmatpush1.xpose.msra.mxu0 0.0
        %546 = vmatprep.subr.mxu0 0.0
        %547 = vmatpush1.xpose.msra.mxu0 0.0
        %548 = vmatprep.subr.mxu0 0.0
        %549 = vmatpush1.xpose.msra.mxu0 0.0
        %550 = vmatprep.subr.mxu0 0.0
        %551 = vmatpush1.xpose.msra.mxu0 0.0
        %552 = vmatprep.subr.mxu0 0.0
        %553 = vmatpush1.xpose.msra.mxu0 0.0
        %554 = vmatprep.subr.mxu0 0.0
        %555 = vmatpush1.xpose.msra.mxu0 0.0
        %556 = vmatprep.subr.mxu0 0.0
        %557 = vmatpush1.xpose.msra.mxu0 0.0
        %558 = vmatprep.subr.mxu0 0.0
        %559 = vmatpush1.xpose.msra.mxu0 0.0
        %560 = vmatprep.subr.mxu0 0.0
        %561 = vmatpush1.xpose.msra.mxu0 0.0
        %562 = vmatprep.subr.mxu0 0.0
        %563 = vmatpush1.xpose.msra.mxu0 0.0
        %564 = vmatprep.subr.mxu0 0.0
        %565 = vmatpush1.xpose.msra.mxu0 0.0
        %566 = vmatprep.subr.mxu0 0.0
        %567 = vmatpush1.xpose.msra.mxu0 0.0
        %568 = vmatprep.subr.mxu0 0.0
        %569 = vmatpush1.xpose.msra.mxu0 %v536
        %570 = vmatprep.subr.mxu0 0.0
        %571 = vmatpush2.xpose.msra.mxu0 0.0
        %572 = vmatprep.subr.mxu0 0.0
        %573 = vmatpush2.xpose.msra.mxu0 0.0
        %574 = vmatprep.subr.mxu0 0.0
        %575 = vmatpush2.xpose.msra.mxu0 0.0
        %576 = vmatprep.subr.mxu0 0.0
        %577 = vmatpush2.xpose.msra.mxu0 0.0
        %578 = vmatprep.subr.mxu0 0.0
        %579 = vmatpush2.xpose.msra.mxu0 0.0
        %580 = vmatprep.subr.mxu0 0.0
        %581 = vmatpush2.xpose.msra.mxu0 0.0
        %582 = vmatprep.subr.mxu0 0.0
        %583 = vmatpush2.xpose.msra.mxu0 0.0
        %584 = vmatprep.subr.mxu0 0.0
        %585 = vmatpush2.xpose.msra.mxu0 0.0
        %586 = vmatprep.subr.mxu0 0.0
        %587 = vmatpush2.xpose.msra.mxu0 0.0
        %588 = vmatprep.subr.mxu0 0.0
        %589 = vmatpush2.xpose.msra.mxu0 0.0
        %590 = vmatprep.subr.mxu0 0.0
        %591 = vmatpush2.xpose.msra.mxu0 0.0
        %592 = vmatprep.subr.mxu0 0.0
        %593 = vmatpush2.xpose.msra.mxu0 0.0
        %594 = vmatprep.subr.mxu0 0.0
        %595 = vmatpush2.xpose.msra.mxu0 0.0
        %596 = vmatprep.subr.mxu0 0.0
        %597 = vmatpush2.xpose.msra.mxu0 0.0
        %598 = vmatprep.subr.mxu0 0.0
        %599 = vmatpush2.xpose.msra.mxu0 0.0
        %600 = vmatprep.subr.mxu0 0.0
        %601 = vmatpush2.xpose.msra.mxu0 0.0
        %602 = vmatprep.mubr.f32.mxu0 0.0
        %603 = vmatmul.mubr.f32.gmra.mxu0 %v534
        %v604 = vpop.f32.mrf.mxu0
        %v605 = vadd.f32 %v243, %v604
        %v606 = vpop.f32.mrf.mxu0
        %607 = vdwg.mxu0
        %v608 = vsel %vm332, %v605, -inf
        %609 = vmax.xlane.f32.xlu0 %v608
        %v610 = vpop.xlane.xlu0 %609
        %v611 = vsub.f32 %v605, %v610
        %v612 = vmul.f32 %v611, 1.442695
        %v613 = vpow.pop %v612
        %v614 = vsel %vm332, %v613, 0.0
        %615 = vadd.xlane.f32.xlu0 %v614
        %v616 = vpop.xlane.xlu0 %615
        %v617 = vrcp.pop %v616
        %v618 = vmul.f32 %v613, %v617
        %619 = vrot.lane.b32.xlu0 %v326, 56
        %v620 = vpop.permute.xlu0 %619
        %622 = vxpose.xlu0.b32.start [1/16] %v620, 128
        %623 = vxpose.xlu0.b32.cont [2/16] 0.0, 128
        %624 = vxpose.xlu0.b32.cont [3/16] 0.0, 128
        %625 = vxpose.xlu0.b32.cont [4/16] 0.0, 128
        %626 = vxpose.xlu0.b32.cont [5/16] 0.0, 128
        %627 = vxpose.xlu0.b32.cont [6/16] 0.0, 128
        %628 = vxpose.xlu0.b32.cont [7/16] 0.0, 128
        %629 = vxpose.xlu0.b32.cont [8/16] 0.0, 128
        %630 = vxpose.xlu0.b32.cont [9/16] 0.0, 128
        %631 = vxpose.xlu0.b32.cont [10/16] 0.0, 128
        %632 = vxpose.xlu0.b32.cont [11/16] 0.0, 128
        %633 = vxpose.xlu0.b32.cont [12/16] 0.0, 128
        %634 = vxpose.xlu0.b32.cont [13/16] 0.0, 128
        %635 = vxpose.xlu0.b32.cont [14/16] 0.0, 128
        %636 = vxpose.xlu0.b32.cont [15/16] 0.0, 128
        %637 = vxpose.xlu0.b32.end [16/16] 0.0, 128
        %v638 = vpop.trf.xlu0
        %v639 = vpop.trf.xlu0
        %v640 = vpop.trf.xlu0
        %v641 = vpop.trf.xlu0
        %v642 = vpop.trf.xlu0
        %v643 = vpop.trf.xlu0
        %v644 = vpop.trf.xlu0
        %v645 = vpop.trf.xlu0
        %v646 = vpop.trf.xlu0
        %v647 = vpop.trf.xlu0
        %v648 = vpop.trf.xlu0
        %v649 = vpop.trf.xlu0
        %v650 = vpop.trf.xlu0
        %v651 = vpop.trf.xlu0
        %v652 = vpop.trf.xlu0
        %v653 = vpop.trf.xlu0
        %v655 = vsel %vm332, %v638, 0
        %v658 = vsel %vm332, %v618, 0
        %660 = vmatprep.subr.mxu0 0.0
        %661 = vmatpush1.xpose.msra.mxu0 0.0
        %662 = vmatprep.subr.mxu0 0.0
        %663 = vmatpush1.xpose.msra.mxu0 0.0
        %664 = vmatprep.subr.mxu0 0.0
        %665 = vmatpush1.xpose.msra.mxu0 0.0
        %666 = vmatprep.subr.mxu0 0.0
        %667 = vmatpush1.xpose.msra.mxu0 0.0
        %668 = vmatprep.subr.mxu0 0.0
        %669 = vmatpush1.xpose.msra.mxu0 0.0
        %670 = vmatprep.subr.mxu0 0.0
        %671 = vmatpush1.xpose.msra.mxu0 0.0
        %672 = vmatprep.subr.mxu0 0.0
        %673 = vmatpush1.xpose.msra.mxu0 0.0
        %674 = vmatprep.subr.mxu0 0.0
        %675 = vmatpush1.xpose.msra.mxu0 0.0
        %676 = vmatprep.subr.mxu0 0.0
        %677 = vmatpush1.xpose.msra.mxu0 0.0
        %678 = vmatprep.subr.mxu0 0.0
        %679 = vmatpush1.xpose.msra.mxu0 0.0
        %680 = vmatprep.subr.mxu0 0.0
        %681 = vmatpush1.xpose.msra.mxu0 0.0
        %682 = vmatprep.subr.mxu0 0.0
        %683 = vmatpush1.xpose.msra.mxu0 0.0
        %684 = vmatprep.subr.mxu0 0.0
        %685 = vmatpush1.xpose.msra.mxu0 0.0
        %686 = vmatprep.subr.mxu0 0.0
        %687 = vmatpush1.xpose.msra.mxu0 0.0
        %688 = vmatprep.subr.mxu0 0.0
        %689 = vmatpush1.xpose.msra.mxu0 0.0
        %690 = vmatprep.subr.mxu0 0.0
        %691 = vmatpush1.xpose.msra.mxu0 %v658
        %692 = vmatprep.subr.mxu0 0.0
        %693 = vmatpush2.xpose.msra.mxu0 0.0
        %694 = vmatprep.subr.mxu0 0.0
        %695 = vmatpush2.xpose.msra.mxu0 0.0
        %696 = vmatprep.subr.mxu0 0.0
        %697 = vmatpush2.xpose.msra.mxu0 0.0
        %698 = vmatprep.subr.mxu0 0.0
        %699 = vmatpush2.xpose.msra.mxu0 0.0
        %700 = vmatprep.subr.mxu0 0.0
        %701 = vmatpush2.xpose.msra.mxu0 0.0
        %702 = vmatprep.subr.mxu0 0.0
        %703 = vmatpush2.xpose.msra.mxu0 0.0
        %704 = vmatprep.subr.mxu0 0.0
        %705 = vmatpush2.xpose.msra.mxu0 0.0
        %706 = vmatprep.subr.mxu0 0.0
        %707 = vmatpush2.xpose.msra.mxu0 0.0
        %708 = vmatprep.subr.mxu0 0.0
        %709 = vmatpush2.xpose.msra.mxu0 0.0
        %710 = vmatprep.subr.mxu0 0.0
        %711 = vmatpush2.xpose.msra.mxu0 0.0
        %712 = vmatprep.subr.mxu0 0.0
        %713 = vmatpush2.xpose.msra.mxu0 0.0
        %714 = vmatprep.subr.mxu0 0.0
        %715 = vmatpush2.xpose.msra.mxu0 0.0
        %716 = vmatprep.subr.mxu0 0.0
        %717 = vmatpush2.xpose.msra.mxu0 0.0
        %718 = vmatprep.subr.mxu0 0.0
        %719 = vmatpush2.xpose.msra.mxu0 0.0
        %720 = vmatprep.subr.mxu0 0.0
        %721 = vmatpush2.xpose.msra.mxu0 0.0
        %722 = vmatprep.subr.mxu0 0.0
        %723 = vmatpush2.xpose.msra.mxu0 0.0
        %724 = vmatprep.mubr.f32.mxu0 0.0
        %725 = vmatmul.mubr.f32.gmra.mxu0 %v655
        %v726 = vpop.f32.mrf.mxu0
        %v727 = vadd.f32 0.0, %v726
        %v728 = vpop.f32.mrf.mxu0
        %729 = vdwg.mxu0
        %730 = vst.msk [vmem:[%s241 + $0x8] sm:$0xff] %vm332, %v727
        %731 = vrot.lane.b32.xlu0 %v326, 112
        %v732 = vpop.permute.xlu0 %731
        %733 = vrot.lane.b32.xlu0 %v326, 80
        %v734 = vpop.permute.xlu0 %733
        %v735 = vsel %vm332, %v732, 0
        %v737 = vsel %vm332, %v734, 0
        %739 = vmatprep.subr.mxu0 0.0
        %740 = vmatpush1.xpose.msra.mxu0 0.0
        %741 = vmatprep.subr.mxu0 0.0
        %742 = vmatpush1.xpose.msra.mxu0 0.0
        %743 = vmatprep.subr.mxu0 0.0
        %744 = vmatpush1.xpose.msra.mxu0 0.0
        %745 = vmatprep.subr.mxu0 0.0
        %746 = vmatpush1.xpose.msra.mxu0 0.0
        %747 = vmatprep.subr.mxu0 0.0
        %748 = vmatpush1.xpose.msra.mxu0 0.0
        %749 = vmatprep.subr.mxu0 0.0
        %750 = vmatpush1.xpose.msra.mxu0 0.0
        %751 = vmatprep.subr.mxu0 0.0
        %752 = vmatpush1.xpose.msra.mxu0 0.0
        %753 = vmatprep.subr.mxu0 0.0
        %754 = vmatpush1.xpose.msra.mxu0 0.0
        %755 = vmatprep.subr.mxu0 0.0
        %756 = vmatpush1.xpose.msra.mxu0 0.0
        %757 = vmatprep.subr.mxu0 0.0
        %758 = vmatpush1.xpose.msra.mxu0 0.0
        %759 = vmatprep.subr.mxu0 0.0
        %760 = vmatpush1.xpose.msra.mxu0 0.0
        %761 = vmatprep.subr.mxu0 0.0
        %762 = vmatpush1.xpose.msra.mxu0 0.0
        %763 = vmatprep.subr.mxu0 0.0
        %764 = vmatpush1.xpose.msra.mxu0 0.0
        %765 = vmatprep.subr.mxu0 0.0
        %766 = vmatpush1.xpose.msra.mxu0 0.0
        %767 = vmatprep.subr.mxu0 0.0
        %768 = vmatpush1.xpose.msra.mxu0 0.0
        %769 = vmatprep.subr.mxu0 0.0
        %770 = vmatpush1.xpose.msra.mxu0 %v737
        %771 = vmatprep.subr.mxu0 0.0
        %772 = vmatpush2.xpose.msra.mxu0 0.0
        %773 = vmatprep.subr.mxu0 0.0
        %774 = vmatpush2.xpose.msra.mxu0 0.0
        %775 = vmatprep.subr.mxu0 0.0
        %776 = vmatpush2.xpose.msra.mxu0 0.0
        %777 = vmatprep.subr.mxu0 0.0
        %778 = vmatpush2.xpose.msra.mxu0 0.0
        %779 = vmatprep.subr.mxu0 0.0
        %780 = vmatpush2.xpose.msra.mxu0 0.0
        %781 = vmatprep.subr.mxu0 0.0
        %782 = vmatpush2.xpose.msra.mxu0 0.0
        %783 = vmatprep.subr.mxu0 0.0
        %784 = vmatpush2.xpose.msra.mxu0 0.0
        %785 = vmatprep.subr.mxu0 0.0
        %786 = vmatpush2.xpose.msra.mxu0 0.0
        %787 = vmatprep.subr.mxu0 0.0
        %788 = vmatpush2.xpose.msra.mxu0 0.0
        %789 = vmatprep.subr.mxu0 0.0
        %790 = vmatpush2.xpose.msra.mxu0 0.0
        %791 = vmatprep.subr.mxu0 0.0
        %792 = vmatpush2.xpose.msra.mxu0 0.0
        %793 = vmatprep.subr.mxu0 0.0
        %794 = vmatpush2.xpose.msra.mxu0 0.0
        %795 = vmatprep.subr.mxu0 0.0
        %796 = vmatpush2.xpose.msra.mxu0 0.0
        %797 = vmatprep.subr.mxu0 0.0
        %798 = vmatpush2.xpose.msra.mxu0 0.0
        %799 = vmatprep.subr.mxu0 0.0
        %800 = vmatpush2.xpose.msra.mxu0 0.0
        %801 = vmatprep.subr.mxu0 0.0
        %802 = vmatpush2.xpose.msra.mxu0 0.0
        %803 = vmatprep.mubr.f32.mxu0 0.0
        %804 = vmatmul.mubr.f32.gmra.mxu0 %v735
        %v805 = vpop.f32.mrf.mxu0
        %v806 = vadd.f32 %v243, %v805
        %v807 = vpop.f32.mrf.mxu0
        %808 = vdwg.mxu0
        %v809 = vsel %vm332, %v806, -inf
        %810 = vmax.xlane.f32.xlu0 %v809
        %v811 = vpop.xlane.xlu0 %810
        %v812 = vsub.f32 %v806, %v811
        %v813 = vmul.f32 %v812, 1.442695
        %v814 = vpow.pop %v813
        %v815 = vsel %vm332, %v814, 0.0
        %816 = vadd.xlane.f32.xlu0 %v815
        %v817 = vpop.xlane.xlu0 %816
        %v818 = vrcp.pop %v817
        %v819 = vmul.f32 %v814, %v818
        %820 = vrot.lane.b32.xlu0 %v326, 48
        %v821 = vpop.permute.xlu0 %820
        %823 = vxpose.xlu0.b32.start [1/16] %v821, 128
        %824 = vxpose.xlu0.b32.cont [2/16] 0.0, 128
        %825 = vxpose.xlu0.b32.cont [3/16] 0.0, 128
        %826 = vxpose.xlu0.b32.cont [4/16] 0.0, 128
        %827 = vxpose.xlu0.b32.cont [5/16] 0.0, 128
        %828 = vxpose.xlu0.b32.cont [6/16] 0.0, 128
        %829 = vxpose.xlu0.b32.cont [7/16] 0.0, 128
        %830 = vxpose.xlu0.b32.cont [8/16] 0.0, 128
        %831 = vxpose.xlu0.b32.cont [9/16] 0.0, 128
        %832 = vxpose.xlu0.b32.cont [10/16] 0.0, 128
        %833 = vxpose.xlu0.b32.cont [11/16] 0.0, 128
        %834 = vxpose.xlu0.b32.cont [12/16] 0.0, 128
        %835 = vxpose.xlu0.b32.cont [13/16] 0.0, 128
        %836 = vxpose.xlu0.b32.cont [14/16] 0.0, 128
        %837 = vxpose.xlu0.b32.cont [15/16] 0.0, 128
        %838 = vxpose.xlu0.b32.end [16/16] 0.0, 128
        %v839 = vpop.trf.xlu0
        %v840 = vpop.trf.xlu0
        %v841 = vpop.trf.xlu0
        %v842 = vpop.trf.xlu0
        %v843 = vpop.trf.xlu0
        %v844 = vpop.trf.xlu0
        %v845 = vpop.trf.xlu0
        %v846 = vpop.trf.xlu0
        %v847 = vpop.trf.xlu0
        %v848 = vpop.trf.xlu0
        %v849 = vpop.trf.xlu0
        %v850 = vpop.trf.xlu0
        %v851 = vpop.trf.xlu0
        %v852 = vpop.trf.xlu0
        %v853 = vpop.trf.xlu0
        %v854 = vpop.trf.xlu0
        %v856 = vsel %vm332, %v839, 0
        %v859 = vsel %vm332, %v819, 0
        %861 = vmatprep.subr.mxu0 0.0
        %862 = vmatpush1.xpose.msra.mxu0 0.0
        %863 = vmatprep.subr.mxu0 0.0
        %864 = vmatpush1.xpose.msra.mxu0 0.0
        %865 = vmatprep.subr.mxu0 0.0
        %866 = vmatpush1.xpose.msra.mxu0 0.0
        %867 = vmatprep.subr.mxu0 0.0
        %868 = vmatpush1.xpose.msra.mxu0 0.0
        %869 = vmatprep.subr.mxu0 0.0
        %870 = vmatpush1.xpose.msra.mxu0 0.0
        %871 = vmatprep.subr.mxu0 0.0
        %872 = vmatpush1.xpose.msra.mxu0 0.0
        %873 = vmatprep.subr.mxu0 0.0
        %874 = vmatpush1.xpose.msra.mxu0 0.0
        %875 = vmatprep.subr.mxu0 0.0
        %876 = vmatpush1.xpose.msra.mxu0 0.0
        %877 = vmatprep.subr.mxu0 0.0
        %878 = vmatpush1.xpose.msra.mxu0 0.0
        %879 = vmatprep.subr.mxu0 0.0
        %880 = vmatpush1.xpose.msra.mxu0 0.0
        %881 = vmatprep.subr.mxu0 0.0
        %882 = vmatpush1.xpose.msra.mxu0 0.0
        %883 = vmatprep.subr.mxu0 0.0
        %884 = vmatpush1.xpose.msra.mxu0 0.0
        %885 = vmatprep.subr.mxu0 0.0
        %886 = vmatpush1.xpose.msra.mxu0 0.0
        %887 = vmatprep.subr.mxu0 0.0
        %888 = vmatpush1.xpose.msra.mxu0 0.0
        %889 = vmatprep.subr.mxu0 0.0
        %890 = vmatpush1.xpose.msra.mxu0 0.0
        %891 = vmatprep.subr.mxu0 0.0
        %892 = vmatpush1.xpose.msra.mxu0 %v859
        %893 = vmatprep.subr.mxu0 0.0
        %894 = vmatpush2.xpose.msra.mxu0 0.0
        %895 = vmatprep.subr.mxu0 0.0
        %896 = vmatpush2.xpose.msra.mxu0 0.0
        %897 = vmatprep.subr.mxu0 0.0
        %898 = vmatpush2.xpose.msra.mxu0 0.0
        %899 = vmatprep.subr.mxu0 0.0
        %900 = vmatpush2.xpose.msra.mxu0 0.0
        %901 = vmatprep.subr.mxu0 0.0
        %902 = vmatpush2.xpose.msra.mxu0 0.0
        %903 = vmatprep.subr.mxu0 0.0
        %904 = vmatpush2.xpose.msra.mxu0 0.0
        %905 = vmatprep.subr.mxu0 0.0
        %906 = vmatpush2.xpose.msra.mxu0 0.0
        %907 = vmatprep.subr.mxu0 0.0
        %908 = vmatpush2.xpose.msra.mxu0 0.0
        %909 = vmatprep.subr.mxu0 0.0
        %910 = vmatpush2.xpose.msra.mxu0 0.0
        %911 = vmatprep.subr.mxu0 0.0
        %912 = vmatpush2.xpose.msra.mxu0 0.0
        %913 = vmatprep.subr.mxu0 0.0
        %914 = vmatpush2.xpose.msra.mxu0 0.0
        %915 = vmatprep.subr.mxu0 0.0
        %916 = vmatpush2.xpose.msra.mxu0 0.0
        %917 = vmatprep.subr.mxu0 0.0
        %918 = vmatpush2.xpose.msra.mxu0 0.0
        %919 = vmatprep.subr.mxu0 0.0
        %920 = vmatpush2.xpose.msra.mxu0 0.0
        %921 = vmatprep.subr.mxu0 0.0
        %922 = vmatpush2.xpose.msra.mxu0 0.0
        %923 = vmatprep.subr.mxu0 0.0
        %924 = vmatpush2.xpose.msra.mxu0 0.0
        %925 = vmatprep.mubr.f32.mxu0 0.0
        %926 = vmatmul.mubr.f32.gmra.mxu0 %v856
        %v927 = vpop.f32.mrf.mxu0
        %v928 = vadd.f32 0.0, %v927
        %v929 = vpop.f32.mrf.mxu0
        %930 = vdwg.mxu0
        %931 = vst.msk [vmem:[%s241 + $0x10] sm:$0xff] %vm332, %v928
        %932 = vrot.lane.b32.xlu0 %v326, 104
        %v933 = vpop.permute.xlu0 %932
        %934 = vrot.lane.b32.xlu0 %v326, 72
        %v935 = vpop.permute.xlu0 %934
        %v936 = vsel %vm332, %v933, 0
        %v938 = vsel %vm332, %v935, 0
        %940 = vmatprep.subr.mxu0 0.0
        %941 = vmatpush1.xpose.msra.mxu0 0.0
        %942 = vmatprep.subr.mxu0 0.0
        %943 = vmatpush1.xpose.msra.mxu0 0.0
        %944 = vmatprep.subr.mxu0 0.0
        %945 = vmatpush1.xpose.msra.mxu0 0.0
        %946 = vmatprep.subr.mxu0 0.0
        %947 = vmatpush1.xpose.msra.mxu0 0.0
        %948 = vmatprep.subr.mxu0 0.0
        %949 = vmatpush1.xpose.msra.mxu0 0.0
        %950 = vmatprep.subr.mxu0 0.0
        %951 = vmatpush1.xpose.msra.mxu0 0.0
        %952 = vmatprep.subr.mxu0 0.0
        %953 = vmatpush1.xpose.msra.mxu0 0.0
        %954 = vmatprep.subr.mxu0 0.0
        %955 = vmatpush1.xpose.msra.mxu0 0.0
        %956 = vmatprep.subr.mxu0 0.0
        %957 = vmatpush1.xpose.msra.mxu0 0.0
        %958 = vmatprep.subr.mxu0 0.0
        %959 = vmatpush1.xpose.msra.mxu0 0.0
        %960 = vmatprep.subr.mxu0 0.0
        %961 = vmatpush1.xpose.msra.mxu0 0.0
        %962 = vmatprep.subr.mxu0 0.0
        %963 = vmatpush1.xpose.msra.mxu0 0.0
        %964 = vmatprep.subr.mxu0 0.0
        %965 = vmatpush1.xpose.msra.mxu0 0.0
        %966 = vmatprep.subr.mxu0 0.0
        %967 = vmatpush1.xpose.msra.mxu0 0.0
        %968 = vmatprep.subr.mxu0 0.0
        %969 = vmatpush1.xpose.msra.mxu0 0.0
        %970 = vmatprep.subr.mxu0 0.0
        %971 = vmatpush1.xpose.msra.mxu0 %v938
        %972 = vmatprep.subr.mxu0 0.0
        %973 = vmatpush2.xpose.msra.mxu0 0.0
        %974 = vmatprep.subr.mxu0 0.0
        %975 = vmatpush2.xpose.msra.mxu0 0.0
        %976 = vmatprep.subr.mxu0 0.0
        %977 = vmatpush2.xpose.msra.mxu0 0.0
        %978 = vmatprep.subr.mxu0 0.0
        %979 = vmatpush2.xpose.msra.mxu0 0.0
        %980 = vmatprep.subr.mxu0 0.0
        %981 = vmatpush2.xpose.msra.mxu0 0.0
        %982 = vmatprep.subr.mxu0 0.0
        %983 = vmatpush2.xpose.msra.mxu0 0.0
        %984 = vmatprep.subr.mxu0 0.0
        %985 = vmatpush2.xpose.msra.mxu0 0.0
        %986 = vmatprep.subr.mxu0 0.0
        %987 = vmatpush2.xpose.msra.mxu0 0.0
        %988 = vmatprep.subr.mxu0 0.0
        %989 = vmatpush2.xpose.msra.mxu0 0.0
        %990 = vmatprep.subr.mxu0 0.0
        %991 = vmatpush2.xpose.msra.mxu0 0.0
        %992 = vmatprep.subr.mxu0 0.0
        %993 = vmatpush2.xpose.msra.mxu0 0.0
        %994 = vmatprep.subr.mxu0 0.0
        %995 = vmatpush2.xpose.msra.mxu0 0.0
        %996 = vmatprep.subr.mxu0 0.0
        %997 = vmatpush2.xpose.msra.mxu0 0.0
        %998 = vmatprep.subr.mxu0 0.0
        %999 = vmatpush2.xpose.msra.mxu0 0.0
        %1000 = vmatprep.subr.mxu0 0.0
        %1001 = vmatpush2.xpose.msra.mxu0 0.0
        %1002 = vmatprep.subr.mxu0 0.0
        %1003 = vmatpush2.xpose.msra.mxu0 0.0
        %1004 = vmatprep.mubr.f32.mxu0 0.0
        %1005 = vmatmul.mubr.f32.gmra.mxu0 %v936
        %v1006 = vpop.f32.mrf.mxu0
        %v1007 = vadd.f32 %v243, %v1006
        %v1008 = vpop.f32.mrf.mxu0
        %1009 = vdwg.mxu0
        %v1010 = vsel %vm332, %v1007, -inf
        %1011 = vmax.xlane.f32.xlu0 %v1010
        %v1012 = vpop.xlane.xlu0 %1011
        %v1013 = vsub.f32 %v1007, %v1012
        %v1014 = vmul.f32 %v1013, 1.442695
        %v1015 = vpow.pop %v1014
        %v1016 = vsel %vm332, %v1015, 0.0
        %1017 = vadd.xlane.f32.xlu0 %v1016
        %v1018 = vpop.xlane.xlu0 %1017
        %v1019 = vrcp.pop %v1018
        %v1020 = vmul.f32 %v1015, %v1019
        %1021 = vrot.lane.b32.xlu0 %v326, 40
        %v1022 = vpop.permute.xlu0 %1021
        %1024 = vxpose.xlu0.b32.start [1/16] %v1022, 128
        %1025 = vxpose.xlu0.b32.cont [2/16] 0.0, 128
        %1026 = vxpose.xlu0.b32.cont [3/16] 0.0, 128
        %1027 = vxpose.xlu0.b32.cont [4/16] 0.0, 128
        %1028 = vxpose.xlu0.b32.cont [5/16] 0.0, 128
        %1029 = vxpose.xlu0.b32.cont [6/16] 0.0, 128
        %1030 = vxpose.xlu0.b32.cont [7/16] 0.0, 128
        %1031 = vxpose.xlu0.b32.cont [8/16] 0.0, 128
        %1032 = vxpose.xlu0.b32.cont [9/16] 0.0, 128
        %1033 = vxpose.xlu0.b32.cont [10/16] 0.0, 128
        %1034 = vxpose.xlu0.b32.cont [11/16] 0.0, 128
        %1035 = vxpose.xlu0.b32.cont [12/16] 0.0, 128
        %1036 = vxpose.xlu0.b32.cont [13/16] 0.0, 128
        %1037 = vxpose.xlu0.b32.cont [14/16] 0.0, 128
        %1038 = vxpose.xlu0.b32.cont [15/16] 0.0, 128
        %1039 = vxpose.xlu0.b32.end [16/16] 0.0, 128
        %v1040 = vpop.trf.xlu0
        %v1041 = vpop.trf.xlu0
        %v1042 = vpop.trf.xlu0
        %v1043 = vpop.trf.xlu0
        %v1044 = vpop.trf.xlu0
        %v1045 = vpop.trf.xlu0
        %v1046 = vpop.trf.xlu0
        %v1047 = vpop.trf.xlu0
        %v1048 = vpop.trf.xlu0
        %v1049 = vpop.trf.xlu0
        %v1050 = vpop.trf.xlu0
        %v1051 = vpop.trf.xlu0
        %v1052 = vpop.trf.xlu0
        %v1053 = vpop.trf.xlu0
        %v1054 = vpop.trf.xlu0
        %v1055 = vpop.trf.xlu0
        %v1057 = vsel %vm332, %v1040, 0
        %v1060 = vsel %vm332, %v1020, 0
        %1062 = vmatprep.subr.mxu0 0.0
        %1063 = vmatpush1.xpose.msra.mxu0 0.0
        %1064 = vmatprep.subr.mxu0 0.0
        %1065 = vmatpush1.xpose.msra.mxu0 0.0
        %1066 = vmatprep.subr.mxu0 0.0
        %1067 = vmatpush1.xpose.msra.mxu0 0.0
        %1068 = vmatprep.subr.mxu0 0.0
        %1069 = vmatpush1.xpose.msra.mxu0 0.0
        %1070 = vmatprep.subr.mxu0 0.0
        %1071 = vmatpush1.xpose.msra.mxu0 0.0
        %1072 = vmatprep.subr.mxu0 0.0
        %1073 = vmatpush1.xpose.msra.mxu0 0.0
        %1074 = vmatprep.subr.mxu0 0.0
        %1075 = vmatpush1.xpose.msra.mxu0 0.0
        %1076 = vmatprep.subr.mxu0 0.0
        %1077 = vmatpush1.xpose.msra.mxu0 0.0
        %1078 = vmatprep.subr.mxu0 0.0
        %1079 = vmatpush1.xpose.msra.mxu0 0.0
        %1080 = vmatprep.subr.mxu0 0.0
        %1081 = vmatpush1.xpose.msra.mxu0 0.0
        %1082 = vmatprep.subr.mxu0 0.0
        %1083 = vmatpush1.xpose.msra.mxu0 0.0
        %1084 = vmatprep.subr.mxu0 0.0
        %1085 = vmatpush1.xpose.msra.mxu0 0.0
        %1086 = vmatprep.subr.mxu0 0.0
        %1087 = vmatpush1.xpose.msra.mxu0 0.0
        %1088 = vmatprep.subr.mxu0 0.0
        %1089 = vmatpush1.xpose.msra.mxu0 0.0
        %1090 = vmatprep.subr.mxu0 0.0
        %1091 = vmatpush1.xpose.msra.mxu0 0.0
        %1092 = vmatprep.subr.mxu0 0.0
        %1093 = vmatpush1.xpose.msra.mxu0 %v1060
        %1094 = vmatprep.subr.mxu0 0.0
        %1095 = vmatpush2.xpose.msra.mxu0 0.0
        %1096 = vmatprep.subr.mxu0 0.0
        %1097 = vmatpush2.xpose.msra.mxu0 0.0
        %1098 = vmatprep.subr.mxu0 0.0
        %1099 = vmatpush2.xpose.msra.mxu0 0.0
        %1100 = vmatprep.subr.mxu0 0.0
        %1101 = vmatpush2.xpose.msra.mxu0 0.0
        %1102 = vmatprep.subr.mxu0 0.0
        %1103 = vmatpush2.xpose.msra.mxu0 0.0
        %1104 = vmatprep.subr.mxu0 0.0
        %1105 = vmatpush2.xpose.msra.mxu0 0.0
        %1106 = vmatprep.subr.mxu0 0.0
        %1107 = vmatpush2.xpose.msra.mxu0 0.0
        %1108 = vmatprep.subr.mxu0 0.0
        %1109 = vmatpush2.xpose.msra.mxu0 0.0
        %1110 = vmatprep.subr.mxu0 0.0
        %1111 = vmatpush2.xpose.msra.mxu0 0.0
        %1112 = vmatprep.subr.mxu0 0.0
        %1113 = vmatpush2.xpose.msra.mxu0 0.0
        %1114 = vmatprep.subr.mxu0 0.0
        %1115 = vmatpush2.xpose.msra.mxu0 0.0
        %1116 = vmatprep.subr.mxu0 0.0
        %1117 = vmatpush2.xpose.msra.mxu0 0.0
        %1118 = vmatprep.subr.mxu0 0.0
        %1119 = vmatpush2.xpose.msra.mxu0 0.0
        %1120 = vmatprep.subr.mxu0 0.0
        %1121 = vmatpush2.xpose.msra.mxu0 0.0
        %1122 = vmatprep.subr.mxu0 0.0
        %1123 = vmatpush2.xpose.msra.mxu0 0.0
        %1124 = vmatprep.subr.mxu0 0.0
        %1125 = vmatpush2.xpose.msra.mxu0 0.0
        %1126 = vmatprep.mubr.f32.mxu0 0.0
        %1127 = vmatmul.mubr.f32.gmra.mxu0 %v1057
        %v1128 = vpop.f32.mrf.mxu0
        %v1129 = vadd.f32 0.0, %v1128
        %v1130 = vpop.f32.mrf.mxu0
        %1131 = vdwg.mxu0
        %1132 = vst.msk [vmem:[%s241 + $0x18] sm:$0xff] %vm332, %v1129
        %p1133 = scmp.lt.s32.totalorder %s19, 1
        %s1134 = scalar_select %p1133, %s19, 1
        %s1135 = smul.addr %s1134, 4
        %s1136 = smul.addr %s1135, 8
        %s1137 = scalar_lea.vmem %s4, %s1136
        // Predicated region
        $region49: #{tpu_custom_call.1} parent=35 // pred_check
          %p1138 = pneg %p126
        $region50: #{tpu_custom_call.1} parent=35 // pred_check_branch
          %1140 = sbr.rel (%p1138) target = $region52
        $region51: #{tpu_custom_call.1} parent=35 // pred_region
          _
        $region52: #{tpu_custom_call.1} parent=35 // pred_fallthru
          _
      $region36: #{tpu_custom_call.1} parent=5 // pred_fallthru
        _
      %p1141 = scmp.le.s32.totalorder 2, %s14
      // Predicated region
      $region53: #{tpu_custom_call.1} parent=5 // pred_check
        %p1142 = pneg %p1141
      $region54: #{tpu_custom_call.1} parent=5 // pred_check_branch
        %1144 = sbr.rel (%p1142) target = $region56
      $region55: #{tpu_custom_call.1} parent=5 // pred_region
        %s1145 = ssub.s32 %s14, 2
        // Predicated region
        $region57: #{tpu_custom_call.1} parent=55 // pred_check
          %p1146 = pneg %p132
        $region58: #{tpu_custom_call.1} parent=55 // pred_check_branch
          %1148 = sbr.rel (%p1146) target = $region60
        $region59: #{tpu_custom_call.1} parent=55 // pred_region
          %p1149 = scmp.lt.s32.totalorder %s20, 1
          %s1150 = scalar_select %p1149, %s20, 1
          %s1151 = smul.addr %s1150, 4
          %s1152 = smul.addr %s1151, 8
          %s1153 = scalar_lea.vmem %s4, %s1152
        $region60: #{tpu_custom_call.1} parent=55 // pred_fallthru
          _
      $region56: #{tpu_custom_call.1} parent=5 // pred_fallthru
        _
    $region6: #{tpu_custom_call.1} parent=1 // loop_footer
      %s18 = sadd.s32 1, %s14
    $region7: #{tpu_custom_call.1} parent=1 // loop_footer_branch
      %13 = sbr.rel target = $region3
    $region8: #{tpu_custom_call.1} parent=1 // loop_exit
      _
    %1154 = vsyncpa [#allocation3], 1
    %s1155 = scalar_lea.sflag [#allocation3], 1
    %1156 = vsyncpa %s1155, 1
    %1157 = vsyncpa [#allocation5], 1

</llo_original>
